<compile_context>
chip_gen: v5e
topology: v5e:2x2
jax: 0.10.0
libtpu: 0.0.40
codegen_flags: <defaults>
</compile_context>

<pallas_src>
import math

import jax
import jax.numpy as jnp
from jax.experimental import pallas as pl
from jax.experimental.pallas import tpu as pltpu

_EPS = 1e-5


def _pick_tile(n, cap):
    if n <= cap:
        return n
    assert n % cap == 0, f"size {n} must be a multiple of tile {cap}"
    return cap


def _vmem_limit_bytes():
    # ~75% of physical VMEM per generation; conservative fallback fits v7x.
    try:
        cap = int(pltpu.get_tpu_info().vmem_capacity_bytes)
        return (cap * 3) // 4
    except Exception:
        return 48 * 1024 * 1024


# ---------------------------------------------------------------------------
# Kernel 1: LayerNorm_1 + QKV projection, grid = (batch, row-blocks, group)
#           group g in {0: Q (pre-scaled by 1/sqrt(d_k)), 1: K, 2: V}.
# Emits head-major (3, B, H, S, d_k) directly (no XLA transpose afterwards).
# ---------------------------------------------------------------------------
def _ln_qkv_kernel(x_ref, ln1w_ref, ln1b_ref, w_ref, b_ref, out_ref, x2_ref):
    @pl.when(pl.program_id(2) == 0)
    def _():
        x = x_ref[0]                                          # (TR, D) f32
        mu = jnp.mean(x, axis=-1, keepdims=True)
        var = jnp.mean((x - mu) ** 2, axis=-1, keepdims=True)
        x2 = (x - mu) * jax.lax.rsqrt(var + _EPS) * ln1w_ref[0] + ln1b_ref[0]
        x2_ref[...] = x2.astype(x2_ref.dtype)                 # reused for g=1,2

    y = jnp.dot(x2_ref[...], w_ref[0],
                preferred_element_type=jnp.float32) + b_ref[0]  # (TR, D) f32
    yb = y.astype(out_ref.dtype)

    n_heads = out_ref.shape[2]
    d_k = out_ref.shape[-1]
    for h in range(n_heads):                                   # static head split
        out_ref[0, 0, h] = yb[:, h * d_k:(h + 1) * d_k]


# ---------------------------------------------------------------------------
# Kernel 2: head-batched attention + out-proj + residual + LN2 + FFN + residual
#           grid = (batch, query-blocks)
# ---------------------------------------------------------------------------
def _attn_ffn_kernel(x_ref, mask_ref, q_ref, k_ref, v_ref,
                     wo_ref, bo_ref, ln2w_ref, ln2b_ref,
                     w1_ref, b1_ref, w2_ref, b2_ref, out_ref, ctx_ref):
    x = x_ref[0]                       # (TQ, D)      f32
    masked = mask_ref[0] == 0          # (TQ, S)      bool (int8 mask, hoisted cmp)
    qh = q_ref[0, 0]                   # (H, TQ, d_k) bf16 (1/sqrt(d_k) pre-folded)
    kh = k_ref[0, 0]                   # (H, S,  d_k) bf16
    vh = v_ref[0, 0]                   # (H, S,  d_k) bf16

    n_heads = qh.shape[0]
    d_k = qh.shape[-1]

    # scores for all heads at once (batched matmul, fp32 accumulation)
    scores = jnp.einsum("hqd,hkd->hqk", qh, kh,
                        preferred_element_type=jnp.float32)    # (H, TQ, S)
    scores = jnp.where(masked[None, :, :], -1e9, scores)

    # numerically-stable softmax; normalization deferred until after PV
    m = jnp.max(scores, axis=-1, keepdims=True)
    e = jnp.exp(scores - m)
    denom = jnp.sum(e, axis=-1, keepdims=True)
    inv = pl.reciprocal(denom, approx=True)                    # (H, TQ, 1)

    # unnormalized PV matmul, then scale the small (H,TQ,d_k) tensor
    ctx = jnp.einsum("hqk,hkd->hqd", e.astype(jnp.bfloat16), vh,
                     preferred_element_type=jnp.float32) * inv

    # assemble lane-dense (TQ, D) context: head h -> columns [h*d_k,(h+1)*d_k)
    for h in range(n_heads):
        ctx_ref[:, h * d_k:(h + 1) * d_k] = ctx[h].astype(ctx_ref.dtype)

    # single full-width output projection (contraction length D, not d_k)
    attn = jnp.dot(ctx_ref[...], wo_ref[...],
                   preferred_element_type=jnp.float32) + bo_ref[0]

    x = x + attn                                               # residual 1 (dropout=id)

    # LayerNorm_2 + feed-forward
    mu = jnp.mean(x, axis=-1, keepdims=True)
    var = jnp.mean((x - mu) ** 2, axis=-1, keepdims=True)
    x2 = (x - mu) * jax.lax.rsqrt(var + _EPS) * ln2w_ref[0] + ln2b_ref[0]

    h1 = jnp.maximum(
        jnp.dot(x2.astype(jnp.bfloat16), w1_ref[...],
                preferred_element_type=jnp.float32) + b1_ref[0], 0.0)
    ff = jnp.dot(h1.astype(jnp.bfloat16), w2_ref[...],
                 preferred_element_type=jnp.float32) + b2_ref[0]

    out_ref[0] = (x + ff).astype(out_ref.dtype)                # residual 2 (dropout=id)


# ---------------------------------------------------------------------------
# Wrapper
# ---------------------------------------------------------------------------
def encoder_layer(x, mask, params, *, heads):
    B, S, D = x.shape
    assert D % heads == 0
    d_k = D // heads
    d_ff = params["w1_t"].shape[1]
    bf16 = jnp.bfloat16
    vmem = _vmem_limit_bytes()

    inv_sqrt_dk = 1.0 / math.sqrt(d_k)
    # 1/sqrt(d_k) folded into the Q projection (zero runtime cost)
    wqkv = jnp.stack([params["wq_t"] * inv_sqrt_dk,
                      params["wk_t"], params["wv_t"]], axis=0).astype(bf16)   # (3,D,D)
    bqkv = jnp.stack([params["bq"] * inv_sqrt_dk,
                      params["bk"], params["bv"]], axis=0).astype(jnp.float32)  # (3,1,D)
    wo = params["wo_t"].astype(bf16)
    w1 = params["w1_t"].astype(bf16)
    w2 = params["w2_t"].astype(bf16)
    mask_i8 = (mask != 0).astype(jnp.int8)      # 4x smaller DMA/VMEM than f32

    # ---------------- kernel 1: LN1 + QKV projection (head-major out) -------
    TR = _pick_tile(S, 256)
    cost1 = pl.CostEstimate(
        flops=int(2 * B * S * D * 3 * D),
        transcendentals=int(B * S),
        bytes_accessed=int(4 * B * S * D + 2 * 3 * B * S * D + 2 * 3 * D * D),
    )

    qkv_hm = pl.pallas_call(
        _ln_qkv_kernel,
        out_shape=jax.ShapeDtypeStruct((3, B, heads, S, d_k), bf16),
        grid_spec=pltpu.PrefetchScalarGridSpec(
            num_scalar_prefetch=0,
            grid=(B, S // TR, 3),
            in_specs=[
                pl.BlockSpec((1, TR, D), lambda b, r, g: (b, r, 0)),   # x
                pl.BlockSpec((1, D), lambda b, r, g: (0, 0)),          # ln1 w
                pl.BlockSpec((1, D), lambda b, r, g: (0, 0)),          # ln1 b
                pl.BlockSpec((1, D, D), lambda b, r, g: (g, 0, 0)),    # W[g]
                pl.BlockSpec((1, 1, D), lambda b, r, g: (g, 0, 0)),    # b[g]
            ],
            out_specs=pl.BlockSpec((1, 1, heads, TR, d_k),
                                   lambda b, r, g: (g, b, 0, r, 0)),
            scratch_shapes=[pltpu.VMEM((TR, D), bf16)],                # LN1(x) reuse
        ),
        compiler_params=pltpu.CompilerParams(
            dimension_semantics=("parallel", "parallel", "arbitrary"),
            vmem_limit_bytes=vmem),
        cost_estimate=cost1,
    )(x, params["ln1_w"], params["ln1_b"], wqkv, bqkv)

    # ---------------- kernel 2: attention + FFN, query-tiled ----------------
    TQ = _pick_tile(S, 256)
    cost2 = pl.CostEstimate(
        flops=int(4 * B * heads * S * S * d_k + 2 * B * S * D * D
                  + 4 * B * S * D * d_ff),
        transcendentals=int(B * heads * S * S + 2 * B * S + B * heads * S),
        bytes_accessed=int(8 * B * S * D + B * S * S + 6 * B * S * D
                           + 2 * (D * D + 2 * D * d_ff)),
    )

    out = pl.pallas_call(
        _attn_ffn_kernel,
        out_shape=jax.ShapeDtypeStruct((B, S, D), x.dtype),
        grid_spec=pltpu.PrefetchScalarGridSpec(
            num_scalar_prefetch=0,
            grid=(B, S // TQ),
            in_specs=[
                pl.BlockSpec((1, TQ, D), lambda b, q: (b, q, 0)),                # x
                pl.BlockSpec((1, TQ, S), lambda b, q: (b, q, 0)),                # mask i8
                pl.BlockSpec((1, 1, heads, TQ, d_k), lambda b, q: (0, b, 0, q, 0)),  # q
                pl.BlockSpec((1, 1, heads, S, d_k), lambda b, q: (1, b, 0, 0, 0)),   # k
                pl.BlockSpec((1, 1, heads, S, d_k), lambda b, q: (2, b, 0, 0, 0)),   # v
                pl.BlockSpec((D, D), lambda b, q: (0, 0)),                       # Wo
                pl.BlockSpec((1, D), lambda b, q: (0, 0)),                       # bo
                pl.BlockSpec((1, D), lambda b, q: (0, 0)),                       # ln2 w
                pl.BlockSpec((1, D), lambda b, q: (0, 0)),                       # ln2 b
                pl.BlockSpec((D, d_ff), lambda b, q: (0, 0)),                    # W1
                pl.BlockSpec((1, d_ff), lambda b, q: (0, 0)),                    # b1
                pl.BlockSpec((d_ff, D), lambda b, q: (0, 0)),                    # W2
                pl.BlockSpec((1, D), lambda b, q: (0, 0)),                       # b2
            ],
            out_specs=pl.BlockSpec((1, TQ, D), lambda b, q: (b, q, 0)),
            scratch_shapes=[pltpu.VMEM((TQ, D), bf16)],   # lane-dense context buffer
        ),
        compiler_params=pltpu.CompilerParams(
            dimension_semantics=("parallel", "parallel"),
            vmem_limit_bytes=vmem),
        cost_estimate=cost2,
    )(x, mask_i8, qkv_hm, qkv_hm, qkv_hm,
      wo, params["bo"], params["ln2_w"], params["ln2_b"],
      w1, params["b1"], w2, params["b2"])

    return out


# ---------------------------------------------------------------------------
# Pure-JAX fp32 reference (mirrors the PyTorch forward, dropout = identity)
# ---------------------------------------------------------------------------
def encoder_layer_ref(x, mask, params, *, heads):
    B, S, D = x.shape
    d_k = D // heads

    def layernorm(z, w, b):
        mu = jnp.mean(z, axis=-1, keepdims=True)
        var = jnp.mean((z - mu) ** 2, axis=-1, keepdims=True)
        return (z - mu) / jnp.sqrt(var + 1e-5) * w[0] + b[0]

    x2 = layernorm(x, params["ln1_w"], params["ln1_b"])
    q = x2 @ params["wq_t"] + params["bq"][0]
    k = x2 @ params["wk_t"] + params["bk"][0]
    v = x2 @ params["wv_t"] + params["bv"][0]

    def split(t):  # (B,S,D) -> (B,H,S,dk)
        return t.reshape(B, S, heads, d_k).transpose(0, 2, 1, 3)

    qh, kh, vh = split(q), split(k), split(v)
    sc = jnp.einsum("bhqd,bhkd->bhqk", qh, kh) / math.sqrt(d_k)
    sc = jnp.where(mask[:, None, :, :] == 0, -1e9, sc)
    p = jax.nn.softmax(sc, axis=-1)
    o = jnp.einsum("bhqk,bhkd->bhqd", p, vh)
    concat = o.transpose(0, 2, 1, 3).reshape(B, S, D)
    x = x + (concat @ params["wo_t"] + params["bo"][0])

    x2 = layernorm(x, params["ln2_w"], params["ln2_b"])
    h1 = jnp.maximum(x2 @ params["w1_t"] + params["b1"][0], 0.0)
    x = x + (h1 @ params["w2_t"] + params["b2"][0])
    return x


# ---------------------------------------------------------------------------
def init_params(key, d_model, d_ff):
    keys = jax.random.split(key, 12)

    def linear(kw, kb, fan_in, fan_out):
        bound = 1.0 / math.sqrt(fan_in)
        w_t = jax.random.uniform(kw, (fan_in, fan_out), jnp.float32, -bound, bound)
        b = jax.random.uniform(kb, (1, fan_out), jnp.float32, -bound, bound)
        return w_t, b

    p = {}
    p["ln1_w"] = jnp.ones((1, d_model), jnp.float32)
    p["ln1_b"] = jnp.zeros((1, d_model), jnp.float32)
    p["ln2_w"] = jnp.ones((1, d_model), jnp.float32)
    p["ln2_b"] = jnp.zeros((1, d_model), jnp.float32)
    p["wq_t"], p["bq"] = linear(keys[0], keys[1], d_model, d_model)
    p["wk_t"], p["bk"] = linear(keys[2], keys[3], d_model, d_model)
    p["wv_t"], p["bv"] = linear(keys[4], keys[5], d_model, d_model)
    p["wo_t"], p["bo"] = linear(keys[6], keys[7], d_model, d_model)
    p["w1_t"], p["b1"] = linear(keys[8], keys[9], d_model, d_ff)
    p["w2_t"], p["b2"] = linear(keys[10], keys[11], d_ff, d_model)
    return p


if __name__ == "__main__":
    B, S, D, HEADS = 2, 8, 32, 4
    D_FF = 2048  # nn.Linear default d_ff in FeedForward

    key = jax.random.PRNGKey(0)
    kx, kmask, kparams = jax.random.split(key, 3)

    x = jax.random.normal(kx, (B, S, D), jnp.float32)
    # binary mask [B, S, S]: 0 => masked position
    mask = (jax.random.uniform(kmask, (B, S, S)) > 0.2).astype(jnp.float32)

    params = init_params(kparams, D, D_FF)

    out = jax.block_until_ready(encoder_layer(x, mask, params, heads=HEADS))
    ref = encoder_layer_ref(x, mask, params, heads=HEADS)

    # bf16 MXU operands (fp32 accumulation) vs pure-fp32 reference tolerance
    if bool(jnp.allclose(out, ref, atol=2e-2, rtol=2e-2)):
        print("KERNEL_OK")
    else:
        print("MISMATCH: max abs err =", float(jnp.max(jnp.abs(out - ref))))
</pallas_src>

<mosaic_0001>
module attributes {stable_mosaic.version = 11 : i64} {
  func.func @_ln_qkv_kernel(%arg0: i32, %arg1: i32, %arg2: i32, %arg3: memref<1x8x32xf32, #tpu.memory_space<vmem>>, %arg4: memref<1x32xf32, #tpu.memory_space<vmem>>, %arg5: memref<1x32xf32, #tpu.memory_space<vmem>>, %arg6: memref<1x32x32xbf16, #tpu.memory_space<vmem>>, %arg7: memref<1x1x32xf32, #tpu.memory_space<vmem>>, %arg8: memref<1x1x4x8x8xbf16, #tpu.memory_space<vmem>>, %arg9: memref<8x32xbf16, #tpu.memory_space<vmem>>) attributes {dimension_semantics = [#tpu.dimension_semantics<parallel>, #tpu.dimension_semantics<parallel>, #tpu.dimension_semantics<arbitrary>], iteration_bounds = array<i64: 2, 1, 3>, scalar_prefetch = 0 : i64, scratch_operands = 1 : i64, tpu.core_type = #tpu.core_type<tc>, window_params = [{transform_indices = @transform_0, window_bounds = array<i64: 1, 8, 32>}, {pipeline_mode = #tpu.pipeline_mode<synchronous>, transform_indices = @transform_1, window_bounds = array<i64: 1, 32>}, {pipeline_mode = #tpu.pipeline_mode<synchronous>, transform_indices = @transform_2, window_bounds = array<i64: 1, 32>}, {transform_indices = @transform_3, window_bounds = array<i64: 1, 32, 32>}, {transform_indices = @transform_4, window_bounds = array<i64: 1, 1, 32>}, {transform_indices = @transform_5, window_bounds = array<i64: 1, 1, 4, 8, 8>}]} {
    %c0_i32 = arith.constant 0 : i32
    %0 = arith.cmpi eq, %arg2, %c0_i32 : i32
    %1 = arith.extui %0 : i1 to i32
    %c0_i32_0 = arith.constant 0 : i32
    %2 = arith.cmpi ne, %1, %c0_i32_0 : i32
    scf.if %2 {
      %c0_25 = arith.constant 0 : index
      %c0_26 = arith.constant 0 : index
      %c0_27 = arith.constant 0 : index
      %28 = vector.load %arg3[%c0_25, %c0_26, %c0_27] : memref<1x8x32xf32, #tpu.memory_space<vmem>>, vector<1x8x32xf32>
      %29 = vector.shape_cast %28 : vector<1x8x32xf32> to vector<8x32xf32>
      %cst_28 = arith.constant dense<0.000000e+00> : vector<8xf32>
      %30 = vector.multi_reduction <add>, %29, %cst_28 [1] : vector<8x32xf32> to vector<8xf32>
      %31 = vector.shape_cast %30 : vector<8xf32> to vector<8x1xf32>
      %cst_29 = arith.constant 3.200000e+01 : f32
      %32 = vector.broadcast %cst_29 : f32 to vector<8x1xf32>
      %33 = arith.divf %31, %32 : vector<8x1xf32>
      %34 = vector.broadcast %33 : vector<8x1xf32> to vector<8x32xf32>
      %35 = arith.subf %29, %34 : vector<8x32xf32>
      %36 = arith.mulf %35, %35 : vector<8x32xf32>
      %cst_30 = arith.constant dense<0.000000e+00> : vector<8xf32>
      %37 = vector.multi_reduction <add>, %36, %cst_30 [1] : vector<8x32xf32> to vector<8xf32>
      %38 = vector.shape_cast %37 : vector<8xf32> to vector<8x1xf32>
      %cst_31 = arith.constant 3.200000e+01 : f32
      %39 = vector.broadcast %cst_31 : f32 to vector<8x1xf32>
      %40 = arith.divf %38, %39 : vector<8x1xf32>
      %41 = vector.broadcast %33 : vector<8x1xf32> to vector<8x32xf32>
      %42 = arith.subf %29, %41 : vector<8x32xf32>
      %cst_32 = arith.constant 9.99999974E-6 : f32
      %43 = vector.broadcast %cst_32 : f32 to vector<8x1xf32>
      %44 = arith.addf %40, %43 : vector<8x1xf32>
      %45 = math.rsqrt %44 : vector<8x1xf32>
      %46 = vector.broadcast %45 : vector<8x1xf32> to vector<8x32xf32>
      %47 = arith.mulf %42, %46 : vector<8x32xf32>
      %c0_33 = arith.constant 0 : index
      %c0_34 = arith.constant 0 : index
      %48 = vector.load %arg4[%c0_33, %c0_34] : memref<1x32xf32, #tpu.memory_space<vmem>>, vector<1x32xf32>
      %49 = vector.shape_cast %48 : vector<1x32xf32> to vector<32xf32>
      %50 = vector.shape_cast %49 : vector<32xf32> to vector<1x32xf32>
      %51 = vector.broadcast %50 : vector<1x32xf32> to vector<8x32xf32>
      %52 = arith.mulf %47, %51 : vector<8x32xf32>
      %c0_35 = arith.constant 0 : index
      %c0_36 = arith.constant 0 : index
      %53 = vector.load %arg5[%c0_35, %c0_36] : memref<1x32xf32, #tpu.memory_space<vmem>>, vector<1x32xf32>
      %54 = vector.shape_cast %53 : vector<1x32xf32> to vector<32xf32>
      %55 = vector.shape_cast %54 : vector<32xf32> to vector<1x32xf32>
      %56 = vector.broadcast %55 : vector<1x32xf32> to vector<8x32xf32>
      %57 = arith.addf %52, %56 : vector<8x32xf32>
      %58 = arith.truncf %57 : vector<8x32xf32> to vector<8x32xbf16>
      %c0_37 = arith.constant 0 : index
      %c0_38 = arith.constant 0 : index
      %59 = vector.load %arg9[%c0_37, %c0_38] : memref<8x32xbf16, #tpu.memory_space<vmem>>, vector<8x32xbf16>
      tpu.vector_store %arg9[%c0_37, %c0_38], %58 {strides = array<i32>} : memref<8x32xbf16, #tpu.memory_space<vmem>>, vector<8x32xbf16>,
    } else {
    }
    %c0 = arith.constant 0 : index
    %c0_1 = arith.constant 0 : index
    %3 = vector.load %arg9[%c0, %c0_1] : memref<8x32xbf16, #tpu.memory_space<vmem>>, vector<8x32xbf16>
    %c0_2 = arith.constant 0 : index
    %c0_3 = arith.constant 0 : index
    %c0_4 = arith.constant 0 : index
    %4 = vector.load %arg6[%c0_2, %c0_3, %c0_4] : memref<1x32x32xbf16, #tpu.memory_space<vmem>>, vector<1x32x32xbf16>
    %5 = vector.shape_cast %4 : vector<1x32x32xbf16> to vector<32x32xbf16>
    %cst = arith.constant dense<0.000000e+00> : vector<8x32xf32>
    %6 = tpu.matmul %3, %5, %cst {dimension_numbers = #tpu.dot_dimension_numbers<[1], [0], [0], [1], [0, 0, 1, 1], [], []>} : vector<8x32xbf16>, vector<32x32xbf16>, vector<8x32xf32> -> vector<8x32xf32>
    %c0_5 = arith.constant 0 : index
    %c0_6 = arith.constant 0 : index
    %c0_7 = arith.constant 0 : index
    %7 = vector.load %arg7[%c0_5, %c0_6, %c0_7] : memref<1x1x32xf32, #tpu.memory_space<vmem>>, vector<1x1x32xf32>
    %8 = vector.shape_cast %7 : vector<1x1x32xf32> to vector<1x32xf32>
    %9 = vector.broadcast %8 : vector<1x32xf32> to vector<8x32xf32>
    %10 = arith.addf %6, %9 : vector<8x32xf32>
    %11 = arith.truncf %10 : vector<8x32xf32> to vector<8x32xbf16>
    %12 = vector.extract_strided_slice %11 {offsets = [0, 0], sizes = [8, 8], strides = [1, 1]} : vector<8x32xbf16> to vector<8x8xbf16>
    %c0_8 = arith.constant 0 : index
    %c0_9 = arith.constant 0 : index
    %c0_10 = arith.constant 0 : index
    %c0_11 = arith.constant 0 : index
    %c0_12 = arith.constant 0 : index
    %13 = vector.load %arg8[%c0_8, %c0_9, %c0_10, %c0_11, %c0_12] : memref<1x1x4x8x8xbf16, #tpu.memory_space<vmem>>, vector<1x1x1x8x8xbf16>
    %14 = vector.shape_cast %13 : vector<1x1x1x8x8xbf16> to vector<8x8xbf16>
    %15 = vector.shape_cast %12 : vector<8x8xbf16> to vector<1x1x1x8x8xbf16>
    tpu.vector_store %arg8[%c0_8, %c0_9, %c0_10, %c0_11, %c0_12], %15 {strides = array<i32>} : memref<1x1x4x8x8xbf16, #tpu.memory_space<vmem>>, vector<1x1x1x8x8xbf16>,
    %16 = vector.extract_strided_slice %11 {offsets = [0, 8], sizes = [8, 8], strides = [1, 1]} : vector<8x32xbf16> to vector<8x8xbf16>
    %c0_13 = arith.constant 0 : index
    %c0_14 = arith.constant 0 : index
    %c1 = arith.constant 1 : index
    %c0_15 = arith.constant 0 : index
    %c0_16 = arith.constant 0 : index
    %17 = vector.load %arg8[%c0_13, %c0_14, %c1, %c0_15, %c0_16] : memref<1x1x4x8x8xbf16, #tpu.memory_space<vmem>>, vector<1x1x1x8x8xbf16>
    %18 = vector.shape_cast %17 : vector<1x1x1x8x8xbf16> to vector<8x8xbf16>
    %19 = vector.shape_cast %16 : vector<8x8xbf16> to vector<1x1x1x8x8xbf16>
    tpu.vector_store %arg8[%c0_13, %c0_14, %c1, %c0_15, %c0_16], %19 {strides = array<i32>} : memref<1x1x4x8x8xbf16, #tpu.memory_space<vmem>>, vector<1x1x1x8x8xbf16>,
    %20 = vector.extract_strided_slice %11 {offsets = [0, 16], sizes = [8, 8], strides = [1, 1]} : vector<8x32xbf16> to vector<8x8xbf16>
    %c0_17 = arith.constant 0 : index
    %c0_18 = arith.constant 0 : index
    %c2 = arith.constant 2 : index
    %c0_19 = arith.constant 0 : index
    %c0_20 = arith.constant 0 : index
    %21 = vector.load %arg8[%c0_17, %c0_18, %c2, %c0_19, %c0_20] : memref<1x1x4x8x8xbf16, #tpu.memory_space<vmem>>, vector<1x1x1x8x8xbf16>
    %22 = vector.shape_cast %21 : vector<1x1x1x8x8xbf16> to vector<8x8xbf16>
    %23 = vector.shape_cast %20 : vector<8x8xbf16> to vector<1x1x1x8x8xbf16>
    tpu.vector_store %arg8[%c0_17, %c0_18, %c2, %c0_19, %c0_20], %23 {strides = array<i32>} : memref<1x1x4x8x8xbf16, #tpu.memory_space<vmem>>, vector<1x1x1x8x8xbf16>,
    %24 = vector.extract_strided_slice %11 {offsets = [0, 24], sizes = [8, 8], strides = [1, 1]} : vector<8x32xbf16> to vector<8x8xbf16>
    %c0_21 = arith.constant 0 : index
    %c0_22 = arith.constant 0 : index
    %c3 = arith.constant 3 : index
    %c0_23 = arith.constant 0 : index
    %c0_24 = arith.constant 0 : index
    %25 = vector.load %arg8[%c0_21, %c0_22, %c3, %c0_23, %c0_24] : memref<1x1x4x8x8xbf16, #tpu.memory_space<vmem>>, vector<1x1x1x8x8xbf16>
    %26 = vector.shape_cast %25 : vector<1x1x1x8x8xbf16> to vector<8x8xbf16>
    %27 = vector.shape_cast %24 : vector<8x8xbf16> to vector<1x1x1x8x8xbf16>
    tpu.vector_store %arg8[%c0_21, %c0_22, %c3, %c0_23, %c0_24], %27 {strides = array<i32>} : memref<1x1x4x8x8xbf16, #tpu.memory_space<vmem>>, vector<1x1x1x8x8xbf16>,
    return
  }
  func.func @transform_0(%arg0: i32, %arg1: i32, %arg2: i32) -> (i32, i32, i32) {
    %c0_i32 = arith.constant 0 : i32
    %c0_i32_0 = arith.constant 0 : i32
    return %arg0, %arg1, %c0_i32 : i32, i32, i32
  }
  func.func @transform_1(%arg0: i32, %arg1: i32, %arg2: i32) -> (i32, i32) {
    %c0_i32 = arith.constant 0 : i32
    %c0_i32_0 = arith.constant 0 : i32
    %c0_i32_1 = arith.constant 0 : i32
    return %c0_i32, %c0_i32_0 : i32, i32
  }
  func.func @transform_2(%arg0: i32, %arg1: i32, %arg2: i32) -> (i32, i32) {
    %c0_i32 = arith.constant 0 : i32
    %c0_i32_0 = arith.constant 0 : i32
    %c0_i32_1 = arith.constant 0 : i32
    return %c0_i32, %c0_i32_0 : i32, i32
  }
  func.func @transform_3(%arg0: i32, %arg1: i32, %arg2: i32) -> (i32, i32, i32) {
    %c0_i32 = arith.constant 0 : i32
    %c0_i32_0 = arith.constant 0 : i32
    %c0_i32_1 = arith.constant 0 : i32
    return %arg2, %c0_i32, %c0_i32_0 : i32, i32, i32
  }
  func.func @transform_4(%arg0: i32, %arg1: i32, %arg2: i32) -> (i32, i32, i32) {
    %c0_i32 = arith.constant 0 : i32
    %c0_i32_0 = arith.constant 0 : i32
    %c0_i32_1 = arith.constant 0 : i32
    return %arg2, %c0_i32, %c0_i32_0 : i32, i32, i32
  }
  func.func @transform_5(%arg0: i32, %arg1: i32, %arg2: i32) -> (i32, i32, i32, i32, i32) {
    %c0_i32 = arith.constant 0 : i32
    %c0_i32_0 = arith.constant 0 : i32
    %c0_i32_1 = arith.constant 0 : i32
    return %arg2, %arg0, %c0_i32, %arg1, %c0_i32_0 : i32, i32, i32, i32, i32
  }
}

</mosaic_0001>

<llo_original>
// kernel: tpu_custom_call.1
$region0: #{tpu_custom_call.1}
  #allocation0 [shape = 'u32[]', space=smem, size = 0x4, offset = 0x4, fixed_abs, tag = 'smem constant byte address 0x4 - core index']
  #allocation1 [shape = 'u32[72,128]{1,0:T(1,128)}', space=vmem, size = 0x9000, scoped, tag = 'internal scratch']
  #allocation2 [shape = 'bf16[8,32]{1,0:T(8,128)(2,1)}', space=vmem, size = 0x800, scoped, tag = 'scratch operand']
  %s0 = inlined_call_operand.hbm [shape: f32[2,8,32], index: 0, kind: input, shape index: {}]
  %s1 = inlined_call_operand.hbm [shape: f32[1,32], index: 1, kind: input, shape index: {}]
  %s2 = inlined_call_operand.hbm [shape: f32[1,32], index: 2, kind: input, shape index: {}]
  %s3 = inlined_call_operand.hbm [shape: bf16[3,32,32], index: 3, kind: input, shape index: {}]
  %s4 = inlined_call_operand.vmem [shape: f32[3,1,32], index: 4, kind: input, shape index: {}]
  %s5 = inlined_call_operand.hbm [shape: bf16[3,2,4,8,8], index: 5, kind: output, shape index: {}]
  %s6 = sld [smem:[#allocation0]]
  $region73: #{tpu_custom_call.1} parent=0
    _
  %s8 = ssub.s32 1, %s6
  %s9 = scalar_select 0, %s8, %s6
  $region1: #{tpu_custom_call.1} parent=0
    #allocation3 [shape = 'u8[8192]{0}', space=vmem, size = 0x2000, scoped, tag = 'input window, operand 0']
    #allocation4 [shape = 's32[2]{0}', space=sflag, size = 0x8, scoped, tag = 'scoped memory for tpu_custom_call.1']
    #allocation5 [shape = 's32[2]{0}', space=sflag, size = 0x8, scoped, tag = 'scoped memory for tpu_custom_call.1']
    #allocation6 [shape = 'u8[512]{0}', space=vmem, size = 0x400, scoped, tag = 'input window, operand 1, single buffered']
    #allocation7 [shape = 's32[1]{0}', space=sflag, size = 0x4, scoped, tag = 'scoped memory for tpu_custom_call.1']
    #allocation8 [shape = 'u8[512]{0}', space=vmem, size = 0x400, scoped, tag = 'input window, operand 2, single buffered']
    #allocation9 [shape = 'u8[16384]{0}', space=vmem, size = 0x4000, scoped, tag = 'input window, operand 3']
    #allocation10 [shape = 's32[2]{0}', space=sflag, size = 0x8, scoped, tag = 'scoped memory for tpu_custom_call.1']
    #allocation11 [shape = 'u8[16384]{0}', space=vmem, size = 0x4000, scoped, tag = 'output window, operand 0']
    %10 = vsyncpa [#allocation4], 0
    %s11 = scalar_lea.sflag [#allocation4], 1
    %12 = vsyncpa %s11, 0
    %13 = vsyncpa [#allocation7], 0
    %14 = vsyncpa [#allocation10], 0
    %s15 = scalar_lea.sflag [#allocation10], 1
    %16 = vsyncpa %s15, 0
    %17 = vsyncpa [#allocation5], 0
    %s18 = scalar_lea.sflag [#allocation5], 1
    %19 = vsyncpa %s18, 0
    loop: start=0, step=1, limit=8
    $region2: #{tpu_custom_call.1} parent=1 // loop_pre_header
      _
    $region3: #{tpu_custom_call.1} parent=1 // loop_header
      %s21 = sphi 0, %s25
      %p22 = scmp.ge.s32.totalorder %s21, 8
      %s28 = sphi 0, %s47
      %s29 = sphi 0, %s43
      %s30 = sphi 0, %s39
      %s31 = sphi 0, %s28
      %s32 = sphi 0, %s29
      %s33 = sphi 0, %s30
      %s34 = sphi 0, %s31
      %s35 = sphi 0, %s32
      %s36 = sphi 0, %s33
      %s52 = sphi 0, %s54
      %s55 = sphi 0, %s52
      %s56 = sphi 0, %s55
      %s72 = sphi 0, %s56
      %s76 = sphi 0, %s76
      %s78 = sphi 0, %s76
      %s79 = sphi 0, %s78
      %s93 = sphi 0, %s79
      %s97 = sphi 0, %s97
      %s99 = sphi 0, %s97
      %s100 = sphi 0, %s99
      %s114 = sphi 0, %s100
      %s120 = sphi 0, %s122
      %s123 = sphi 0, %s120
      %s124 = sphi 0, %s123
      %s140 = sphi 0, %s124
      %s146 = sphi 0, %s148
      %s149 = sphi 0, %s146
      %s150 = sphi 0, %s149
      %s166 = sphi 0, %s150
      %s176 = sphi 0, %s178
      %s179 = sphi 0, %s176
      %s180 = sphi 0, %s179
      %s196 = sphi 0, %s180
    $region4: #{tpu_custom_call.1} parent=1 // loop_header_branch
      %24 = sbr.rel (%p22) target = $region8
    $region5: #{tpu_custom_call.1} parent=1 // loop_body
      %s26 = ssub.s32 %s21, 1
      %s27 = ssub.s32 %s21, 2
      %s37 = sadd.s32 1, %s30
      %p38 = scmp.ge.s32.totalorder %s37, 3
      %s39 = scalar_select %p38, 0, %s37
      %s40 = sadd.s32 1, %s29
      %s41 = scalar_select %p38, %s40, %s29
      %p42 = scmp.ge.s32.totalorder %s41, 1
      %s43 = scalar_select %p42, 0, %s41
      %s44 = sadd.s32 1, %s28
      %s45 = scalar_select %p42, %s44, %s28
      %p46 = scmp.ge.s32.totalorder %s45, 2
      %s47 = scalar_select %p46, 0, %s45
      %s48 = ssub.s32 %s28, %s47
      %s49 = ssub.s32 %s29, %s43
      %s50 = sor.u32 %s48, %s49
      %p51 = scmp.eq.s32.totalorder %s50, 0
      %s53 = sadd.s32 %s52, 1
      %s54 = scalar_select %p51, %s52, %s53
      %p57 = pneg %p51
      %p58 = scmp.eq.s32.totalorder %s21, 5
      %p59 = por %p57, %p58
      %p60 = scmp.ne.s32.totalorder %s52, %s55
      %p61 = scmp.eq.s32.totalorder %s21, 0
      %p62 = por %p60, %p61
      %p63 = scmp.ne.s32.totalorder %s52, %s55
      %p64 = scmp.eq.s32.totalorder %s26, 5
      %p65 = por %p63, %p64
      %p66 = scmp.ne.s32.totalorder %s55, %s56
      %p67 = scmp.eq.s32.totalorder %s26, 0
      %p68 = por %p66, %p67
      %p69 = scmp.ne.s32.totalorder %s55, %s56
      %p70 = scmp.eq.s32.totalorder %s27, 5
      %p71 = por %p69, %p70
      %p73 = scmp.ne.s32.totalorder %s56, %s72
      %p74 = scmp.eq.s32.totalorder %s27, 0
      %p75 = por %p73, %p74
      %s77 = sadd.s32 %s76, 1
      %p80 = scmp.eq.s32.totalorder %s21, 5
      %p81 = scmp.ne.s32.totalorder %s76, %s78
      %p82 = scmp.eq.s32.totalorder %s21, 0
      %p83 = por %p81, %p82
      %p84 = scmp.ne.s32.totalorder %s76, %s78
      %p85 = scmp.eq.s32.totalorder %s26, 5
      %p86 = por %p84, %p85
      %p87 = scmp.ne.s32.totalorder %s78, %s79
      %p88 = scmp.eq.s32.totalorder %s26, 0
      %p89 = por %p87, %p88
      %p90 = scmp.ne.s32.totalorder %s78, %s79
      %p91 = scmp.eq.s32.totalorder %s27, 5
      %p92 = por %p90, %p91
      %p94 = scmp.ne.s32.totalorder %s79, %s93
      %p95 = scmp.eq.s32.totalorder %s27, 0
      %p96 = por %p94, %p95
      %s98 = sadd.s32 %s97, 1
      %p101 = scmp.eq.s32.totalorder %s21, 5
      %p102 = scmp.ne.s32.totalorder %s97, %s99
      %p103 = scmp.eq.s32.totalorder %s21, 0
      %p104 = por %p102, %p103
      %p105 = scmp.ne.s32.totalorder %s97, %s99
      %p106 = scmp.eq.s32.totalorder %s26, 5
      %p107 = por %p105, %p106
      %p108 = scmp.ne.s32.totalorder %s99, %s100
      %p109 = scmp.eq.s32.totalorder %s26, 0
      %p110 = por %p108, %p109
      %p111 = scmp.ne.s32.totalorder %s99, %s100
      %p112 = scmp.eq.s32.totalorder %s27, 5
      %p113 = por %p111, %p112
      %p115 = scmp.ne.s32.totalorder %s100, %s114
      %p116 = scmp.eq.s32.totalorder %s27, 0
      %p117 = por %p115, %p116
      %s118 = ssub.s32 %s30, %s39
      %p119 = scmp.eq.s32.totalorder %s118, 0
      %s121 = sadd.s32 %s120, 1
      %s122 = scalar_select %p119, %s120, %s121
      %p125 = pneg %p119
      %p126 = scmp.eq.s32.totalorder %s21, 5
      %p127 = por %p125, %p126
      %p128 = scmp.ne.s32.totalorder %s120, %s123
      %p129 = scmp.eq.s32.totalorder %s21, 0
      %p130 = por %p128, %p129
      %p131 = scmp.ne.s32.totalorder %s120, %s123
      %p132 = scmp.eq.s32.totalorder %s26, 5
      %p133 = por %p131, %p132
      %p134 = scmp.ne.s32.totalorder %s123, %s124
      %p135 = scmp.eq.s32.totalorder %s26, 0
      %p136 = por %p134, %p135
      %p137 = scmp.ne.s32.totalorder %s123, %s124
      %p138 = scmp.eq.s32.totalorder %s27, 5
      %p139 = por %p137, %p138
      %p141 = scmp.ne.s32.totalorder %s124, %s140
      %p142 = scmp.eq.s32.totalorder %s27, 0
      %p143 = por %p141, %p142
      %s144 = ssub.s32 %s30, %s39
      %p145 = scmp.eq.s32.totalorder %s144, 0
      %s147 = sadd.s32 %s146, 1
      %s148 = scalar_select %p145, %s146, %s147
      %p151 = pneg %p145
      %p152 = scmp.eq.s32.totalorder %s21, 5
      %p153 = por %p151, %p152
      %p154 = scmp.ne.s32.totalorder %s146, %s149
      %p155 = scmp.eq.s32.totalorder %s21, 0
      %p156 = por %p154, %p155
      %p157 = scmp.ne.s32.totalorder %s146, %s149
      %p158 = scmp.eq.s32.totalorder %s26, 5
      %p159 = por %p157, %p158
      %p160 = scmp.ne.s32.totalorder %s149, %s150
      %p161 = scmp.eq.s32.totalorder %s26, 0
      %p162 = por %p160, %p161
      %p163 = scmp.ne.s32.totalorder %s149, %s150
      %p164 = scmp.eq.s32.totalorder %s27, 5
      %p165 = por %p163, %p164
      %p167 = scmp.ne.s32.totalorder %s150, %s166
      %p168 = scmp.eq.s32.totalorder %s27, 0
      %p169 = por %p167, %p168
      %s170 = ssub.s32 %s30, %s39
      %s171 = ssub.s32 %s28, %s47
      %s172 = sor.u32 %s170, %s171
      %s173 = ssub.s32 %s29, %s43
      %s174 = sor.u32 %s172, %s173
      %p175 = scmp.eq.s32.totalorder %s174, 0
      %s177 = sadd.s32 %s176, 1
      %s178 = scalar_select %p175, %s176, %s177
      %p181 = pneg %p175
      %p182 = scmp.eq.s32.totalorder %s21, 5
      %p183 = por %p181, %p182
      %p184 = scmp.ne.s32.totalorder %s176, %s179
      %p185 = scmp.eq.s32.totalorder %s21, 0
      %p186 = por %p184, %p185
      %p187 = scmp.ne.s32.totalorder %s176, %s179
      %p188 = scmp.eq.s32.totalorder %s26, 5
      %p189 = por %p187, %p188
      %p190 = scmp.ne.s32.totalorder %s179, %s180
      %p191 = scmp.eq.s32.totalorder %s26, 0
      %p192 = por %p190, %p191
      %p193 = scmp.ne.s32.totalorder %s179, %s180
      %p194 = scmp.eq.s32.totalorder %s27, 5
      %p195 = por %p193, %p194
      %p197 = scmp.ne.s32.totalorder %s180, %s196
      %p198 = scmp.eq.s32.totalorder %s27, 0
      %p199 = por %p197, %p198
      %p200 = scmp.le.s32.totalorder 1, %s21
      %p201 = scmp.lt.s32.totalorder %s21, 7
      %p202 = pnand %p200, %p201
      %p203 = pneg %p202
      // Predicated region
      $region9: #{tpu_custom_call.1} parent=5 // pred_check
        _
      $region10: #{tpu_custom_call.1} parent=5 // pred_check_branch
        %205 = sbr.rel (%p202) target = $region12
      $region11: #{tpu_custom_call.1} parent=5 // pred_region
        %s206 = ssub.s32 %s21, 1
        // Predicated region
        $region13: #{tpu_custom_call.1} parent=11 // pred_check
          %p207 = pneg %p89
        $region14: #{tpu_custom_call.1} parent=11 // pred_check_branch
          %209 = sbr.rel (%p207) target = $region16
        $region15: #{tpu_custom_call.1} parent=11 // pred_region
          %211 = vsyncadd [#allocation7], 0
          %s213 = sshll.u32 %s1, 4
          %s214 = int_to_ptr.hbm [resolvable:$true] %s213
          %s215 = sshll.u32 [#allocation6], 4
          %s216 = int_to_ptr.vmem [resolvable:$true] %s215
          %218 = dma.hbm_to_vmem [thread:$0]  %s214, 16, %s216, [#allocation7]
        $region16: #{tpu_custom_call.1} parent=11 // pred_fallthru
          _
        // Predicated region
        $region17: #{tpu_custom_call.1} parent=11 // pred_check
          %p219 = pneg %p110
        $region18: #{tpu_custom_call.1} parent=11 // pred_check_branch
          %221 = sbr.rel (%p219) target = $region20
        $region19: #{tpu_custom_call.1} parent=11 // pred_region
          %223 = vsyncadd [#allocation7], 0
          %s225 = sshll.u32 %s2, 4
          %s226 = int_to_ptr.hbm [resolvable:$true] %s225
          %s227 = sshll.u32 [#allocation8], 4
          %s228 = int_to_ptr.vmem [resolvable:$true] %s227
          %230 = dma.hbm_to_vmem [thread:$0]  %s226, 16, %s228, [#allocation7]
        $region20: #{tpu_custom_call.1} parent=11 // pred_fallthru
          _
      $region12: #{tpu_custom_call.1} parent=5 // pred_fallthru
        _
      %p231 = scmp.lt.s32.totalorder %s21, 6
      // Predicated region
      $region21: #{tpu_custom_call.1} parent=5 // pred_check
        %p232 = pneg %p231
      $region22: #{tpu_custom_call.1} parent=5 // pred_check_branch
        %234 = sbr.rel (%p232) target = $region24
      $region23: #{tpu_custom_call.1} parent=5 // pred_region
        // Predicated region
        $region25: #{tpu_custom_call.1} parent=23 // pred_check
          %p235 = pneg %p62
        $region26: #{tpu_custom_call.1} parent=23 // pred_check_branch
          %237 = sbr.rel (%p235) target = $region28
        $region27: #{tpu_custom_call.1} parent=23 // pred_region
          %s238 = sand.u32 %s52, 1
          %s239 = scalar_lea.sflag [#allocation4], %s238
          %s240 = sand.u32 %s52, 1
          %s241 = smul.addr %s240, 8
          %s242 = scalar_lea.vmem [#allocation3], %s241
          %244 = vsyncadd %s239, 0
          %s245 = sadd.s32 %s29, %s28
          %s246 = smul.addr %s245, 8
          %s247 = scalar_lea.hbm %s0, %s246
          %s249 = sshll.u32 %s247, 4
          %s250 = int_to_ptr.hbm [resolvable:$true] %s249
          %s251 = sshll.u32 %s242, 4
          %s252 = int_to_ptr.vmem [resolvable:$true] %s251
          %254 = dma.hbm_to_vmem [thread:$0]  %s250, 128, %s252, %s239
        $region28: #{tpu_custom_call.1} parent=23 // pred_fallthru
          _
        // Predicated region
        $region29: #{tpu_custom_call.1} parent=23 // pred_check
          %p255 = pneg %p130
        $region30: #{tpu_custom_call.1} parent=23 // pred_check_branch
          %257 = sbr.rel (%p255) target = $region32
        $region31: #{tpu_custom_call.1} parent=23 // pred_region
          %s258 = sand.u32 %s120, 1
          %s259 = scalar_lea.sflag [#allocation10], %s258
          %s260 = sand.u32 %s120, 1
          %s261 = smul.addr %s260, 16
          %s262 = scalar_lea.vmem [#allocation9], %s261
          %264 = vsyncadd %s259, 0
          %s265 = smul.addr %s30, 4
          %s266 = smul.addr %s265, 4
          %s267 = scalar_lea.hbm %s3, %s266
          %s268 = sshll.u32 %s267, 4
          %s269 = int_to_ptr.hbm [resolvable:$true] %s268
          %s270 = sshll.u32 %s262, 4
          %s271 = int_to_ptr.vmem [resolvable:$true] %s270
          %276 = dma.hbm_to_vmem [thread:$0]  %s269, 256, %s271, %s259, 64, 64, 4
        $region32: #{tpu_custom_call.1} parent=23 // pred_fallthru
          _
        // Predicated region
        $region33: #{tpu_custom_call.1} parent=23 // pred_check
          %p277 = pneg %p156
        $region34: #{tpu_custom_call.1} parent=23 // pred_check_branch
          %279 = sbr.rel (%p277) target = $region36
        $region35: #{tpu_custom_call.1} parent=23 // pred_region
          %p280 = scmp.lt.s32.totalorder %s30, 2
          %s281 = scalar_select %p280, %s30, 2
          %s282 = scalar_lea.vmem %s4, %s281
        $region36: #{tpu_custom_call.1} parent=23 // pred_fallthru
          _
      $region24: #{tpu_custom_call.1} parent=5 // pred_fallthru
        _
      %p283 = scmp.le.s32.totalorder 1, %s21
      %p284 = scmp.lt.s32.totalorder %s21, 7
      %p285 = pnand %p283, %p284
      %p286 = pneg %p285
      // Predicated region
      $region37: #{tpu_custom_call.1} parent=5 // pred_check
        _
      $region38: #{tpu_custom_call.1} parent=5 // pred_check_branch
        %288 = sbr.rel (%p285) target = $region40
      $region39: #{tpu_custom_call.1} parent=5 // pred_region
        %s289 = ssub.s32 %s21, 1
        %s290 = sand.u32 %s55, 1
        %s291 = scalar_lea.sflag [#allocation4], %s290
        %s292 = sand.u32 %s55, 1
        %s293 = smul.addr %s292, 8
        %s294 = scalar_lea.vmem [#allocation3], %s293
        // Predicated region
        $region41: #{tpu_custom_call.1} parent=39 // pred_check
          %p295 = pneg %p68
        $region42: #{tpu_custom_call.1} parent=39 // pred_check_branch
          %297 = sbr.rel (%p295) target = $region44
        $region43: #{tpu_custom_call.1} parent=39 // pred_region
          %299 = dma.done %s291, 128
        $region44: #{tpu_custom_call.1} parent=39 // pred_fallthru
          _
        // Predicated region
        $region45: #{tpu_custom_call.1} parent=39 // pred_check
          %p300 = pneg %p89
        $region46: #{tpu_custom_call.1} parent=39 // pred_check_branch
          %302 = sbr.rel (%p300) target = $region48
        $region47: #{tpu_custom_call.1} parent=39 // pred_region
          %304 = dma.done [#allocation7], 16
        $region48: #{tpu_custom_call.1} parent=39 // pred_fallthru
          _
        // Predicated region
        $region49: #{tpu_custom_call.1} parent=39 // pred_check
          %p305 = pneg %p110
        $region50: #{tpu_custom_call.1} parent=39 // pred_check_branch
          %307 = sbr.rel (%p305) target = $region52
        $region51: #{tpu_custom_call.1} parent=39 // pred_region
          %309 = dma.done [#allocation7], 16
        $region52: #{tpu_custom_call.1} parent=39 // pred_fallthru
          _
        %s310 = sand.u32 %s123, 1
        %s311 = scalar_lea.sflag [#allocation10], %s310
        %s312 = sand.u32 %s123, 1
        %s313 = smul.addr %s312, 16
        %s314 = scalar_lea.vmem [#allocation9], %s313
        // Predicated region
        $region53: #{tpu_custom_call.1} parent=39 // pred_check
          %p315 = pneg %p136
        $region54: #{tpu_custom_call.1} parent=39 // pred_check_branch
          %317 = sbr.rel (%p315) target = $region56
        $region55: #{tpu_custom_call.1} parent=39 // pred_region
          %319 = dma.done %s311, 256
        $region56: #{tpu_custom_call.1} parent=39 // pred_fallthru
          _
        %s320 = sand.u32 %s55, 1
        %s321 = scalar_lea.sflag [#allocation4], %s320
        %s322 = sand.u32 %s55, 1
        %s323 = smul.addr %s322, 8
        %s324 = scalar_lea.vmem [#allocation3], %s323
        %p325 = pneg %p68
        %p326 = pneg %p65
        %p327 = pneg %p89
        %p328 = pneg %p86
        %p329 = pneg %p110
        %p330 = pneg %p107
        %s331 = sand.u32 %s123, 1
        %s332 = scalar_lea.sflag [#allocation10], %s331
        %s333 = sand.u32 %s123, 1
        %s334 = smul.addr %s333, 16
        %s335 = scalar_lea.vmem [#allocation9], %s334
        %p336 = pneg %p136
        %p337 = pneg %p133
        %p338 = scmp.lt.s32.totalorder %s33, 2
        %s339 = scalar_select %p338, %s33, 2
        %s340 = scalar_lea.vmem %s4, %s339
        %p341 = pneg %p162
        %p342 = pneg %p159
        %p343 = pneg %p192
        %p344 = pneg %p189
        %s345 = sand.u32 %s179, 1
        %s346 = scalar_lea.sflag [#allocation5], %s345
        %s347 = sand.u32 %s179, 1
        %s348 = smul.addr %s347, 16
        %s349 = scalar_lea.vmem [#allocation11], %s348
        %p350 = scmp.lt.s32.totalorder %s33, 2
        %s351 = scalar_select %p350, %s33, 2
        %s352 = scalar_lea.vmem %s4, %s351
        %p354 = scmp.eq.s32.totalorder %s33, 0
        // Predicated region
        $region57: #{tpu_custom_call.1} parent=39 // pred_check
          %p355 = pneg %p354
        $region58: #{tpu_custom_call.1} parent=39 // pred_check_branch
          %357 = sbr.rel (%p355) target = $region60
        $region59: #{tpu_custom_call.1} parent=39 // pred_region
          %v358 = vld [vmem:[%s294] sm:$0xff]
          %vm359 = vcmask 261120
          %v360 = vsel %vm359, %v358, 0.0
          %361 = vadd.xlane.f32.xlu0 %v360
          %v362 = vpop.xlane.xlu0 %361
          %v363 = vrcp.pop 32.0
          %v364 = vmul.f32 32.0, %v363
          %v365 = vsub.f32 1.0, %v364
          %v366 = vmul.f32 %v363, %v365
          %v367 = vadd.f32 %v363, %v366
          %vm368 = vweird.f32 %v363
          %v369 = vsel %vm368, %v363, %v367
          %v370 = vmul.f32 %v362, %v369
          %v371 = vsub.f32 %v358, %v370
          %v372 = vmul.f32 %v371, %v371
          %v373 = vsel %vm359, %v372, 0.0
          %374 = vadd.xlane.f32.xlu0 %v373
          %v375 = vpop.xlane.xlu0 %374
          %v376 = vmul.f32 %v375, %v369
          %v377 = vadd.f32 %v376, 1e-05
          %v378 = vrsqrt.pop %v377
          %v379 = vmul.f32 %v378, %v377
          %v380 = vmul.f32 %v379, %v378
          %v381 = vmul.f32 0.5, %v380
          %v382 = vsub.f32 1.5, %v381
          %v383 = vmul.f32 %v378, %v382
          %vm384 = vweird.f32 %v377
          %vm385 = vweird.f32 %v378
          %vm386 = vmor %vm384, %vm385
          %v387 = vsel %vm386, %v378, %v383
          %v388 = vmul.f32 %v371, %v387
          %v389 = vld [vmem:[#allocation6] sm:$0x1]
          %v391 = vperm.slane %v389, 0
          %v393 = vmul.f32 %v388, %v391
          %v394 = vld [vmem:[#allocation8] sm:$0x1]
          %v396 = vperm.slane %v394, 0
          %v398 = vadd.f32 %v393, %v396
          %v399 = vpack.c.bf16 %v398, %v398
          %vm400 = vcmask 257024
          %401 = vst.msk [vmem:[#allocation2] sm:$0xf] %vm400, %v399
        $region60: #{tpu_custom_call.1} parent=39 // pred_fallthru
          _
        %v402 = vld [vmem:[#allocation2] sm:$0xf]
        %v403 = vld [vmem:[%s314] sm:$0xf]
        %v404 = vld [vmem:[%s314 + $0x4] sm:$0xf]
        %v405 = vld [vmem:[%s314 + $0x8] sm:$0xf]
        %v406 = vld [vmem:[%s314 + $0xc] sm:$0xf]
        %v407 = vld [vmem:[%s352] sm:$0x1]
        %v409 = vperm.slane %v407, 0
        %v415 = vunpack.c.l.b16 %v403
        %v416 = vunpack.c.l.b16 %v404
        %v417 = vunpack.c.l.b16 %v405
        %v418 = vunpack.c.l.b16 %v406
        %v419 = vpack.c.b16 %v416, %v415
        %v420 = vpack.c.b16 %v418, %v417
        %vm423 = vcmask 261120
        %v425 = vsel %vm423, %v402, 0
        %427 = vmatpush.bf16.msra.mxu0 0
        %428 = vmatpush.bf16.msra.mxu0 0
        %429 = vmatpush.bf16.msra.mxu0 0
        %430 = vmatpush.bf16.msra.mxu0 0
        %431 = vmatpush.bf16.msra.mxu0 0
        %432 = vmatpush.bf16.msra.mxu0 0
        %433 = vmatpush.bf16.msra.mxu0 %v420
        %434 = vmatpush.bf16.msra.mxu0 %v419
        %435 = vmatmul.bf16.gmra.mxu0 %v425
        %v436 = vpop.f32.mrf.mxu0
        %v437 = vadd.f32 %v409, %v436
        %v438 = vpop.f32.mrf.mxu0
        %439 = vdwg.mxu0
        %v440 = vpack.c.bf16 %v437, %v437
        %vm441 = vcmask 60416
        %442 = vst.msk [vmem:[%s349] sm:$0xf] %vm441, %v440
        %444 = vrot.lane.b32.xlu0 %v440, 120
        %v445 = vpop.permute.xlu0 %444
        %s447 = scalar_lea.vmem %s349, 4 [#allocation11]
        %448 = vst.msk [vmem:[%s447] sm:$0xf] %vm441, %v445
        %449 = vrot.lane.b32.xlu0 %v440, 112
        %v450 = vpop.permute.xlu0 %449
        %s452 = scalar_lea.vmem %s349, 8 [#allocation11]
        %453 = vst.msk [vmem:[%s452] sm:$0xf] %vm441, %v450
        %454 = vrot.lane.b32.xlu0 %v440, 104
        %v455 = vpop.permute.xlu0 %454
        %s457 = scalar_lea.vmem %s349, 12 [#allocation11]
        %458 = vst.msk [vmem:[%s457] sm:$0xf] %vm441, %v455
        %s459 = sand.u32 %s179, 1
        %s460 = scalar_lea.sflag [#allocation5], %s459
        %s461 = sand.u32 %s179, 1
        %s462 = smul.addr %s461, 16
        %s463 = scalar_lea.vmem [#allocation11], %s462
        // Predicated region
        $region61: #{tpu_custom_call.1} parent=39 // pred_check
          %p464 = pneg %p189
        $region62: #{tpu_custom_call.1} parent=39 // pred_check_branch
          %466 = sbr.rel (%p464) target = $region64
        $region63: #{tpu_custom_call.1} parent=39 // pred_region
          %468 = vsyncadd %s460, 0
          %s469 = smul.addr %s31, 4
          %s470 = sadd.s32 %s32, %s469
          %s471 = smul.addr %s33, 8
          %s472 = sadd.s32 %s470, %s471
          %s473 = smul.addr %s472, 4
          %s474 = scalar_lea.hbm %s5, %s473
          %s475 = sshll.u32 %s463, 4
          %s476 = int_to_ptr.vmem [resolvable:$true] %s475
          %s477 = sshll.u32 %s474, 4
          %s478 = int_to_ptr.hbm [resolvable:$true] %s477
          %483 = dma.vmem_to_hbm [thread:$0]  %s476, 256, %s478, %s460, 64, 64, 4
        $region64: #{tpu_custom_call.1} parent=39 // pred_fallthru
          _
      $region40: #{tpu_custom_call.1} parent=5 // pred_fallthru
        _
      %p484 = scmp.le.s32.totalorder 2, %s21
      // Predicated region
      $region65: #{tpu_custom_call.1} parent=5 // pred_check
        %p485 = pneg %p484
      $region66: #{tpu_custom_call.1} parent=5 // pred_check_branch
        %487 = sbr.rel (%p485) target = $region68
      $region67: #{tpu_custom_call.1} parent=5 // pred_region
        %s488 = ssub.s32 %s21, 2
        // Predicated region
        $region69: #{tpu_custom_call.1} parent=67 // pred_check
          %p489 = pneg %p195
        $region70: #{tpu_custom_call.1} parent=67 // pred_check_branch
          %491 = sbr.rel (%p489) target = $region72
        $region71: #{tpu_custom_call.1} parent=67 // pred_region
          %s492 = sand.u32 %s180, 1
          %s493 = scalar_lea.sflag [#allocation5], %s492
          %s494 = sand.u32 %s180, 1
          %s495 = smul.addr %s494, 16
          %s496 = scalar_lea.vmem [#allocation11], %s495
          %498 = dma.done %s493, 256
        $region72: #{tpu_custom_call.1} parent=67 // pred_fallthru
          _
      $region68: #{tpu_custom_call.1} parent=5 // pred_fallthru
        _
    $region6: #{tpu_custom_call.1} parent=1 // loop_footer
      %s25 = sadd.s32 1, %s21
    $region7: #{tpu_custom_call.1} parent=1 // loop_footer_branch
      %20 = sbr.rel target = $region3
    $region8: #{tpu_custom_call.1} parent=1 // loop_exit
      _
    %499 = vsyncpa [#allocation4], 1
    %s500 = scalar_lea.sflag [#allocation4], 1
    %501 = vsyncpa %s500, 1
    %502 = vsyncpa [#allocation7], 1
    %503 = vsyncpa [#allocation10], 1
    %s504 = scalar_lea.sflag [#allocation10], 1
    %505 = vsyncpa %s504, 1
    %506 = vsyncpa [#allocation5], 1
    %s507 = scalar_lea.sflag [#allocation5], 1
    %508 = vsyncpa %s507, 1

</llo_original>
